<compile_context>
chip_gen: v7x
topology: tpu7x:2x2x1
jax: 0.10.0
libtpu: 0.0.40
codegen_flags: <defaults>
</compile_context>

<pallas_src>
import jax
import jax.numpy as jnp
from jax.experimental import pallas as pl
from jax.experimental.pallas import tpu as pltpu


def _copy_kernel(x_ref, o_ref):
    # Straight VMEM copy of the current lane-dense tile.
    o_ref[...] = x_ref[...]


_LANE_CANDIDATES = (4096, 2048, 1024, 512, 256, 128)  # lane-dense widths (x128)
_TILE_BYTES = 2 << 20  # ~2 MiB per tile buffer; x4 with in/out double-buffering


def _sublane_multiple(dtype) -> int:
    """Native sublane granularity for the dtype (vreg packs sub-32-bit rows)."""
    itemsize = jnp.dtype(dtype).itemsize
    if itemsize >= 4:
        return 8
    if itemsize == 2:
        return 16
    return 32


def _round_up(x: int, m: int) -> int:
    return ((x + m - 1) // m) * m


def _tiled_copy_2d(x2: jax.Array) -> jax.Array:
    """Lane-dense, row-tiled HBM->HBM copy of a 2-D array via Pallas."""
    M, L = x2.shape
    itemsize = jnp.dtype(x2.dtype).itemsize
    sub = _sublane_multiple(x2.dtype)

    # Fixed row tile: largest multiple of the dtype sublane granularity whose
    # (tm, L) tile fits the per-buffer byte budget.  cdiv grid tolerates a
    # masked trailing block, so no divisor-of-M requirement.
    rows_budget = max(sub, (_TILE_BYTES // max(1, L * itemsize)) // sub * sub)
    tm = M if M <= rows_budget else rows_budget

    grid = (pl.cdiv(M, tm),)
    return pl.pallas_call(
        _copy_kernel,
        out_shape=jax.ShapeDtypeStruct((M, L), x2.dtype),
        grid_spec=pltpu.PrefetchScalarGridSpec(
            num_scalar_prefetch=0,
            grid=grid,
            in_specs=[pl.BlockSpec((tm, L), lambda i: (i, 0))],
            out_specs=pl.BlockSpec((tm, L), lambda i: (i, 0)),
        ),
        compiler_params=pltpu.CompilerParams(
            dimension_semantics=("parallel",),
        ),
        cost_estimate=pl.CostEstimate(
            flops=0,
            transcendentals=0,
            bytes_accessed=2 * M * L * itemsize,
        ),
    )(x2)


def identity(x: jax.Array) -> jax.Array:
    """Identity.forward(x) -> x.

    A true Identity requires no kernel launch and no HBM traffic; returning
    the input unchanged is the optimal implementation on v5e / v6e / v7x.
    """
    return x


@jax.jit
def identity_pallas(x: jax.Array) -> jax.Array:
    """Explicit Pallas-backed identity: materializes a fresh copy of `x`.

    Only use when a distinct output buffer must be produced; the internal
    layout is re-packed lane-dense purely for full-bandwidth DMAs.
    """
    orig_shape = x.shape
    total = int(x.size)
    if total == 0:
        return x

    flat = x.reshape(-1)

    # Widest lane-dense width (multiple of 128) that divides the element count.
    lanes = None
    for cand in _LANE_CANDIDATES:
        if total % cand == 0:
            lanes = cand
            break

    if lanes is None:
        # Pad to a multiple of 8*128 so the copy stays lane-dense with
        # bounded-VMEM tiles (never whole-array-resident), then slice back.
        # TODO(synk): fold the pad/slice into the kernel via a masked trailing
        # tile to avoid the extra padded pass for huge odd-sized tensors.
        padded = _round_up(total, 8 * 128)
        flat_p = jnp.pad(flat, (0, padded - total))
        lanes_p = 128
        for cand in _LANE_CANDIDATES:
            if padded % cand == 0:
                lanes_p = cand
                break
        out = _tiled_copy_2d(flat_p.reshape(padded // lanes_p, lanes_p))
        out = out.reshape(-1)[:total]
    else:
        out = _tiled_copy_2d(flat.reshape(total // lanes, lanes)).reshape(-1)

    return out.reshape(orig_shape)


if __name__ == "__main__":
    key = jax.random.PRNGKey(0)
    x = jax.random.normal(key, (2, 4, 16, 16), dtype=jnp.float32)

    # Zero-cost path: Identity.forward returns its input untouched.
    y = identity(x)
    assert y is x, "identity() must return its input unchanged"

    # Pallas copy path (exercises the kernel).
    y_copy = jax.block_until_ready(identity_pallas(x))
    assert y_copy.shape == x.shape, (y_copy.shape, x.shape)
    assert y_copy.dtype == x.dtype, (y_copy.dtype, x.dtype)
    assert jnp.array_equal(y_copy, x), "Identity kernel output mismatch"

    # Padded fallback path (element count not a multiple of 128).
    x_odd = jax.random.normal(jax.random.PRNGKey(1), (3, 5, 7), dtype=jnp.float32)
    y_odd = jax.block_until_ready(identity_pallas(x_odd))
    assert y_odd.shape == x_odd.shape
    assert jnp.array_equal(y_odd, x_odd), "Identity padded-path output mismatch"

    print("KERNEL_OK")
</pallas_src>

<mosaic_0001>
module attributes {stable_mosaic.version = 11 : i64} {
  func.func @_copy_kernel(%arg0: i32, %arg1: memref<1x2048xf32, #tpu.memory_space<vmem>>, %arg2: memref<1x2048xf32, #tpu.memory_space<vmem>>) attributes {dimension_semantics = [#tpu.dimension_semantics<parallel>], iteration_bounds = array<i64: 1>, scalar_prefetch = 0 : i64, scratch_operands = 0 : i64, tpu.core_type = #tpu.core_type<tc>, window_params = [{transform_indices = @transform_0, window_bounds = array<i64: 1, 2048>}, {transform_indices = @transform_1, window_bounds = array<i64: 1, 2048>}]} {
    %c0 = arith.constant 0 : index
    %c0_0 = arith.constant 0 : index
    %0 = vector.load %arg1[%c0, %c0_0] : memref<1x2048xf32, #tpu.memory_space<vmem>>, vector<1x2048xf32>
    %c0_1 = arith.constant 0 : index
    %c0_2 = arith.constant 0 : index
    %1 = vector.load %arg2[%c0_1, %c0_2] : memref<1x2048xf32, #tpu.memory_space<vmem>>, vector<1x2048xf32>
    tpu.vector_store %arg2[%c0_1, %c0_2], %0 {strides = array<i32>} : memref<1x2048xf32, #tpu.memory_space<vmem>>, vector<1x2048xf32>,
    return
  }
  func.func @transform_0(%arg0: i32) -> (i32, i32) {
    %c0_i32 = arith.constant 0 : i32
    %c0_i32_0 = arith.constant 0 : i32
    return %arg0, %c0_i32 : i32, i32
  }
  func.func @transform_1(%arg0: i32) -> (i32, i32) {
    %c0_i32 = arith.constant 0 : i32
    %c0_i32_0 = arith.constant 0 : i32
    return %arg0, %c0_i32 : i32, i32
  }
}

</mosaic_0001>

<llo_original>
// kernel: identity_pallas.1
$region0: #{identity_pallas.1}
  #allocation0 [shape = 'u32[]', space=smem, size = 0x4, offset = 0x4, fixed_abs, tag = 'smem constant byte address 0x4 - core index']
  #allocation1 [shape = 'u32[144,128]{1,0:T(1,128)}', space=vmem, size = 0x12000, scoped, tag = 'internal scratch']
  %s0 = inlined_call_operand.vmem [shape: f32[1,2048], index: 0, kind: input, shape index: {}]
  %s1 = inlined_call_operand.vmem [shape: f32[1,2048], index: 1, kind: output, shape index: {}]
  %s2 = sld [smem:[#allocation0]]
  $region14: #{identity_pallas.1} parent=0
    _
  %s4 = ssub.s32 1, %s2
  %s5 = scalar_select 0, %s4, %s2
  // Predicated region
  $region2: #{identity_pallas.1} parent=0 // pred_check
    _
  $region3: #{identity_pallas.1} parent=0 // pred_check_branch
    %7 = sbr.rel (0) target = $region5
  $region4: #{identity_pallas.1} parent=0 // pred_region
    _
  $region5: #{identity_pallas.1} parent=0 // pred_fallthru
    _
  %v8 = vld [vmem:[%s0] sm:$0xff]
  %v9 = vld [vmem:[%s0 + $0x8] sm:$0xff]
  %10 = vst [vmem:[%s1] sm:$0xff] %v8
  %11 = vst [vmem:[%s1 + $0x8] sm:$0xff] %v9
  // Predicated region
  $region6: #{identity_pallas.1} parent=0 // pred_check
    _
  $region7: #{identity_pallas.1} parent=0 // pred_check_branch
    %13 = sbr.rel (0) target = $region9
  $region8: #{identity_pallas.1} parent=0 // pred_region
    _
  $region9: #{identity_pallas.1} parent=0 // pred_fallthru
    _
  // Predicated region
  $region10: #{identity_pallas.1} parent=0 // pred_check
    _
  $region11: #{identity_pallas.1} parent=0 // pred_check_branch
    %15 = sbr.rel (0) target = $region13
  $region12: #{identity_pallas.1} parent=0 // pred_region
    _
  $region13: #{identity_pallas.1} parent=0 // pred_fallthru
    _

</llo_original>
